<compile_context>
chip_gen: v6e
topology: v6e:2x2x1
jax: 0.10.0
libtpu: 0.0.40
codegen_flags: <defaults>
</compile_context>

<pallas_src>
import numpy as np
import jax
import jax.numpy as jnp
from jax.experimental import pallas as pl
from jax.experimental.pallas import tpu as pltpu


# ----------------------------- filter precompute (numpy, trace-time) -----------------

def _hilbert_window(L: int) -> np.ndarray:
    """1-D Hilbert frequency filter (same as HilbertTransform._precompute)."""
    h = np.zeros(L, dtype=np.float64)
    h[0] = 1.0
    if L % 2 == 0:
        h[L // 2] = 1.0
        h[1:L // 2] = 2.0
    else:
        h[1:(L + 1) // 2] = 2.0
    return h


def _dft_matrix(L: int) -> np.ndarray:
    k = np.arange(L)
    return np.exp(-2j * np.pi * np.outer(k, k) / L)


def _transform_matrices(L1: int, L2: int):
    """Complex A (L1,L1), B (L2,L2) with z = A @ x @ B == ifft2(fft2(x) * h)."""
    F1, F2 = _dft_matrix(L1), _dft_matrix(L2)
    IF1, IF2 = np.conj(F1) / L1, np.conj(F2) / L2
    h1, h2 = _hilbert_window(L1), _hilbert_window(L2)
    A = IF1 @ np.diag(h1) @ F1
    B = F2 @ np.diag(h2) @ IF2
    return A, B


def _fused_filter(L1: int, L2: int):
    """(D, 2D) real operator: vec_row(z) = vec_row(x) @ [Re(K) | Im(K)], K = kron(A^T, B)."""
    A, B = _transform_matrices(L1, L2)
    K = np.kron(A.T, B)                                   # row-major vec convention
    W = np.concatenate([K.real, K.imag], axis=1)
    return jnp.asarray(W, jnp.float32)


def _separable_filters(L1: int, L2: int):
    """Real Ha, Hb with A = I + i*Ha, B = I + i*Hb (real parts are exactly identity)."""
    A, B = _transform_matrices(L1, L2)
    return jnp.asarray(A.imag, jnp.float32), jnp.asarray(B.imag, jnp.float32)


# ----------------------------- Pallas kernels ----------------------------------------

def _hilbert2_fused_kernel(x_ref, w_ref, out_ref):
    # One lane-dense MXU matmul, batch folded into M: (TB, D) @ (D, 2D) -> (TB, 2D).
    out_ref[...] = jnp.dot(x_ref[...], w_ref[...], preferred_element_type=jnp.float32)


def _hilbert2_separable_kernel(x_ref, ha_ref, hb_ref, zr_ref, zi_ref):
    TB, L1, L2 = x_ref.shape                               # L1 is a multiple of 8 here
    x = x_ref[...]
    # Right multiply as a single big-M 2-D matmul (reshape is a layout no-op).
    yi = jnp.dot(x.reshape(TB * L1, L2), hb_ref[...],
                 preferred_element_type=jnp.float32).reshape(TB, L1, L2)
    # Both left multiplies fused into one Ha contraction; Ha broadcasts implicitly.
    cat = jnp.concatenate([x, yi], axis=-1)                # (TB, L1, 2*L2)
    hcat = jnp.einsum('ij,bjk->bik', ha_ref[...], cat,
                      preferred_element_type=jnp.float32)
    zr_ref[...] = x - hcat[..., L2:]                       # Re(z) = x - Ha x Hb
    zi_ref[...] = hcat[..., :L2] + yi                      # Im(z) = Ha x + x Hb


# ----------------------------- tiling helpers ----------------------------------------

def _round_up(v: int, m: int) -> int:
    return -(-v // m) * m


def _vmem_capacity_bytes() -> int:
    try:
        cap = getattr(pltpu.get_tpu_info(), "vmem_capacity_bytes", None)
        if cap and int(cap) >= 16 * 1024 * 1024:
            return int(cap)
    except Exception:
        pass
    return 64 * 1024 * 1024          # v7x-safe fallback (v5e/v6e have 128 MiB)


def _pick_batch_tile(N, bytes_per_sample, reserved_bytes, vmem_cap):
    """Largest samples-per-step fitting the (8,128)-padded VMEM budget."""
    budget = max(1 << 20, int(vmem_cap * 0.45) - reserved_bytes)
    tb = max(8, budget // max(bytes_per_sample, 1))
    tb = min(tb, 4096)                       # M beyond a few thousand rows adds nothing
    if N >= 16:                              # keep >= 2 grid steps so both v7x TCs get work
        tb = min(tb, _round_up(pl.cdiv(N, 2), 8))
    tb = max(8, tb - tb % 8)                 # sublane multiple when tiling the batch axis
    return N if tb >= N else tb              # full-axis block allowed for any N


# ----------------------------- path wrappers -----------------------------------------

def _hilbert2_fused(x3, L1, L2, vmem_cap):
    N = x3.shape[0]
    D = L1 * L2
    w = _fused_filter(L1, L2)                               # (D, 2D) f32, fetched once
    xf = x3.reshape(N, D)                                   # free reshape (contiguous)

    w_bytes = 4 * _round_up(D, 8) * _round_up(2 * D, 128)
    per_sample = 2 * 4 * (_round_up(D, 128) + _round_up(2 * D, 128))   # dbl-buffered in+out
    TB = _pick_batch_tile(N, per_sample, 2 * w_bytes + (2 << 20), vmem_cap)
    grid = (pl.cdiv(N, TB),)                 # ragged tail handled by Pallas masking

    out = pl.pallas_call(
        _hilbert2_fused_kernel,
        out_shape=jax.ShapeDtypeStruct((N, 2 * D), jnp.float32),
        grid=grid,
        in_specs=[
            pl.BlockSpec((TB, D), lambda n: (n, 0)),
            pl.BlockSpec((D, 2 * D), lambda n: (0, 0)),     # constant block: fetched once
        ],
        out_specs=pl.BlockSpec((TB, 2 * D), lambda n: (n, 0)),
        compiler_params=pltpu.CompilerParams(
            dimension_semantics=("parallel",),
            vmem_limit_bytes=int(vmem_cap * 0.7),
        ),
        cost_estimate=pl.CostEstimate(
            flops=int(2 * N * D * 2 * D),
            transcendentals=0,
            bytes_accessed=int(4 * (N * D + N * 2 * D + D * 2 * D)),
        ),
    )(xf, w)

    # TODO(synk): no f32-pair -> complex64 bitcast is exposed; the stacked [Re | Im]
    # output lets XLA fuse slice + complexification into one extra HBM pass.
    return jax.lax.complex(out[:, :D], out[:, D:]).reshape(N, L1, L2)


def _hilbert2_separable(x3, L1, L2, vmem_cap):
    N = x3.shape[0]
    ha, hb = _separable_filters(L1, L2)
    # Keep the in-kernel (TB, L1, L2) <-> (TB*L1, L2) reshape a layout no-op.
    L1p = _round_up(L1, 8)
    if L1p != L1:
        x3 = jnp.pad(x3, ((0, 0), (0, L1p - L1), (0, 0)))
        ha = jnp.pad(ha, ((0, L1p - L1), (0, L1p - L1)))

    h_bytes = 4 * (L1p * _round_up(L1p, 128) + _round_up(L2, 8) * _round_up(L2, 128))
    slab = 4 * L1p * _round_up(L2, 128)                     # physical bytes per (L1p, L2) slab
    per_sample = 2 * slab * 3                               # dbl-buffered x + zr + zi blocks
    TB = _pick_batch_tile(N, per_sample, 2 * h_bytes + (2 << 20), vmem_cap)
    grid = (pl.cdiv(N, TB),)

    zr, zi = pl.pallas_call(
        _hilbert2_separable_kernel,
        out_shape=(jax.ShapeDtypeStruct((N, L1p, L2), jnp.float32),
                   jax.ShapeDtypeStruct((N, L1p, L2), jnp.float32)),
        grid=grid,
        in_specs=[
            pl.BlockSpec((TB, L1p, L2), lambda n: (n, 0, 0)),
            pl.BlockSpec((L1p, L1p), lambda n: (0, 0)),
            pl.BlockSpec((L2, L2), lambda n: (0, 0)),
        ],
        out_specs=[
            pl.BlockSpec((TB, L1p, L2), lambda n: (n, 0, 0)),
            pl.BlockSpec((TB, L1p, L2), lambda n: (n, 0, 0)),
        ],
        compiler_params=pltpu.CompilerParams(
            dimension_semantics=("parallel",),
            vmem_limit_bytes=int(vmem_cap * 0.7),
        ),
        cost_estimate=pl.CostEstimate(
            flops=int(2 * N * L1p * L2 * L2 + 4 * N * L1p * L1p * L2),
            transcendentals=0,
            bytes_accessed=int(4 * (3 * N * L1p * L2 + L1p * L1p + L2 * L2)),
        ),
    )(x3, ha, hb)
    return jax.lax.complex(zr[:, :L1, :], zi[:, :L1, :])


# ----------------------------- public wrapper ----------------------------------------

def _fit_to_fft_length(x, L1, L2):
    """torch.fft.fft2(x, s=(L1, L2)) pad/truncate semantics on the last two dims."""
    x = x[..., :min(x.shape[-2], L1), :min(x.shape[-1], L2)]
    if x.shape[-2] == L1 and x.shape[-1] == L2:
        return x
    pad = [(0, 0)] * (x.ndim - 2) + [(0, L1 - x.shape[-2]), (0, L2 - x.shape[-1])]
    return jnp.pad(x, pad)


def hilbert2(x, fft_length=None, dim=(-2, -1)):
    """Analytic signal via 2-D Hilbert transform; matches the PyTorch module's forward."""
    if fft_length is None:
        fft_length = (x.shape[dim[0]], x.shape[dim[1]])
    if isinstance(fft_length, int):
        fft_length = (fft_length, fft_length)
    L1, L2 = int(fft_length[0]), int(fft_length[1])

    x = jnp.moveaxis(x, dim, (-2, -1)).astype(jnp.float32)   # no-op for default dim
    x = _fit_to_fft_length(x, L1, L2)
    lead = x.shape[:-2]
    N = int(np.prod(lead)) if lead else 1
    x3 = x.reshape(N, L1, L2)

    vmem_cap = _vmem_capacity_bytes()
    D = L1 * L2
    if D <= 512:
        z3 = _hilbert2_fused(x3, L1, L2, vmem_cap)      # single lane-dense matmul path
    else:
        z3 = _hilbert2_separable(x3, L1, L2, vmem_cap)  # separable 2-matmul path

    z = z3.reshape(*lead, L1, L2)
    return jnp.moveaxis(z, (-2, -1), dim)


# ----------------------------- demo / self-check --------------------------------------

if __name__ == "__main__":
    key = jax.random.PRNGKey(0)
    B, C, T1, T2 = 2, 4, 16, 16
    x = jax.random.normal(key, (B, C, T1, T2), dtype=jnp.float32)

    z = jax.block_until_ready(hilbert2(x, fft_length=(T1, T2)))

    # Reference: the module's exact forward, ifft2(fft2(x, s=L) * h).
    h1 = jnp.asarray(_hilbert_window(T1), jnp.float32)
    h2 = jnp.asarray(_hilbert_window(T2), jnp.float32)
    h = (h1[:, None] * h2[None, :]).reshape(1, 1, T1, T2)
    X = jnp.fft.fft2(x, s=(T1, T2), axes=(-2, -1))
    z_ref = jnp.fft.ifft2(X * h, s=(T1, T2), axes=(-2, -1))

    assert z.shape == (B, C, T1, T2) and z.dtype == jnp.complex64
    np.testing.assert_allclose(np.asarray(z.real), np.asarray(z_ref.real), atol=5e-4, rtol=5e-4)
    np.testing.assert_allclose(np.asarray(z.imag), np.asarray(z_ref.imag), atol=5e-4, rtol=5e-4)

    print("KERNEL_OK")
</pallas_src>

<mosaic_0001>
module attributes {stable_mosaic.version = 11 : i64} {
  func.func @_hilbert2_fused_kernel(%arg0: i32, %arg1: memref<8x256xf32, #tpu.memory_space<vmem>>, %arg2: memref<256x512xf32, #tpu.memory_space<vmem>>, %arg3: memref<8x512xf32, #tpu.memory_space<vmem>>) attributes {dimension_semantics = [#tpu.dimension_semantics<parallel>], iteration_bounds = array<i64: 1>, scalar_prefetch = 0 : i64, scratch_operands = 0 : i64, tpu.core_type = #tpu.core_type<tc>, window_params = [{transform_indices = @transform_0, window_bounds = array<i64: 8, 256>}, {pipeline_mode = #tpu.pipeline_mode<synchronous>, transform_indices = @transform_1, window_bounds = array<i64: 256, 512>}, {transform_indices = @transform_2, window_bounds = array<i64: 8, 512>}]} {
    %c0 = arith.constant 0 : index
    %c0_0 = arith.constant 0 : index
    %0 = vector.load %arg1[%c0, %c0_0] : memref<8x256xf32, #tpu.memory_space<vmem>>, vector<8x256xf32>
    %c0_1 = arith.constant 0 : index
    %c0_2 = arith.constant 0 : index
    %1 = vector.load %arg2[%c0_1, %c0_2] : memref<256x512xf32, #tpu.memory_space<vmem>>, vector<256x512xf32>
    %cst = arith.constant dense<0.000000e+00> : vector<8x512xf32>
    %2 = tpu.matmul %0, %1, %cst {dimension_numbers = #tpu.dot_dimension_numbers<[1], [0], [0], [1], [0, 0, 1, 1], [], []>} : vector<8x256xf32>, vector<256x512xf32>, vector<8x512xf32> -> vector<8x512xf32>
    %c0_3 = arith.constant 0 : index
    %c0_4 = arith.constant 0 : index
    %3 = vector.load %arg3[%c0_3, %c0_4] : memref<8x512xf32, #tpu.memory_space<vmem>>, vector<8x512xf32>
    tpu.vector_store %arg3[%c0_3, %c0_4], %2 {strides = array<i32>} : memref<8x512xf32, #tpu.memory_space<vmem>>, vector<8x512xf32>,
    return
  }
  func.func @transform_0(%arg0: i32) -> (i32, i32) {
    %c0_i32 = arith.constant 0 : i32
    %c0_i32_0 = arith.constant 0 : i32
    return %arg0, %c0_i32 : i32, i32
  }
  func.func @transform_1(%arg0: i32) -> (i32, i32) {
    %c0_i32 = arith.constant 0 : i32
    %c0_i32_0 = arith.constant 0 : i32
    %c0_i32_1 = arith.constant 0 : i32
    return %c0_i32, %c0_i32_0 : i32, i32
  }
  func.func @transform_2(%arg0: i32) -> (i32, i32) {
    %c0_i32 = arith.constant 0 : i32
    %c0_i32_0 = arith.constant 0 : i32
    return %arg0, %c0_i32 : i32, i32
  }
}

</mosaic_0001>

<llo_original>
// kernel: tpu_custom_call.1
$region0: #{tpu_custom_call.1}
  #allocation0 [shape = 'u32[]', space=smem, size = 0x4, offset = 0x4, fixed_abs, tag = 'smem constant byte address 0x4 - core index']
  #allocation1 [shape = 'u32[144,128]{1,0:T(1,128)}', space=vmem, size = 0x12000, scoped, tag = 'internal scratch']
  %s0 = inlined_call_operand.hbm [shape: f32[8,256], index: 0, kind: input, shape index: {}]
  %s1 = inlined_call_operand.hbm [shape: f32[256,512], index: 1, kind: input, shape index: {}]
  %s2 = inlined_call_operand.hbm [shape: f32[8,512], index: 2, kind: output, shape index: {}]
  %s3 = sld [smem:[#allocation0]]
  $region26: #{tpu_custom_call.1} parent=0
    _
  %s5 = ssub.s32 1, %s3
  %s6 = scalar_select 0, %s5, %s3
  $region1: #{tpu_custom_call.1} parent=0
    #allocation2 [shape = 'u8[8192]{0}', space=vmem, size = 0x2000, scoped, tag = 'input window, operand 0, single buffered']
    #allocation3 [shape = 's32[1]{0}', space=sflag, size = 0x4, scoped, tag = 'scoped memory for tpu_custom_call.1']
    #allocation4 [shape = 's32[1]{0}', space=sflag, size = 0x4, scoped, tag = 'scoped memory for tpu_custom_call.1']
    #allocation5 [shape = 'u8[524288]{0}', space=vmem, size = 0x80000, scoped, tag = 'input window, operand 1, single buffered']
    #allocation6 [shape = 's32[1]{0}', space=sflag, size = 0x4, scoped, tag = 'scoped memory for tpu_custom_call.1']
    #allocation7 [shape = 'u8[16384]{0}', space=vmem, size = 0x4000, scoped, tag = 'output window, operand 0, single buffered']
    %7 = vsyncpa [#allocation3], 0
    %8 = vsyncpa [#allocation6], 0
    %9 = vsyncpa [#allocation4], 0
    // Predicated region
    $region2: #{tpu_custom_call.1} parent=1 // pred_check
      _
    $region3: #{tpu_custom_call.1} parent=1 // pred_check_branch
      %11 = sbr.rel (0) target = $region5
    $region4: #{tpu_custom_call.1} parent=1 // pred_region
      %s13 = ssub.s32 256, 256
      %14 = vsyncadd [#allocation3], %s13
      %s16 = sshll.u32 [#allocation2], 4
      %s17 = int_to_ptr.vmem [resolvable:$true] %s16
      %19 = dma.hbm_to_vmem [thread:$0]  %s0, 256, %s17, [#allocation3]
    $region5: #{tpu_custom_call.1} parent=1 // pred_fallthru
      _
    // Predicated region
    $region6: #{tpu_custom_call.1} parent=1 // pred_check
      _
    $region7: #{tpu_custom_call.1} parent=1 // pred_check_branch
      %21 = sbr.rel (0) target = $region9
    $region8: #{tpu_custom_call.1} parent=1 // pred_region
      %s23 = ssub.s32 16384, 16384
      %24 = vsyncadd [#allocation6], %s23
      %s25 = sshll.u32 [#allocation5], 4
      %s26 = int_to_ptr.vmem [resolvable:$true] %s25
      %31 = dma.hbm_to_vmem [thread:$0]  %s1, 16384, %s26, [#allocation6], 512, 512, 32
    $region9: #{tpu_custom_call.1} parent=1 // pred_fallthru
      _
    // Predicated region
    $region10: #{tpu_custom_call.1} parent=1 // pred_check
      _
    $region11: #{tpu_custom_call.1} parent=1 // pred_check_branch
      %33 = sbr.rel (0) target = $region13
    $region12: #{tpu_custom_call.1} parent=1 // pred_region
      %34 = dma.done [#allocation3], 256
    $region13: #{tpu_custom_call.1} parent=1 // pred_fallthru
      _
    // Predicated region
    $region14: #{tpu_custom_call.1} parent=1 // pred_check
      _
    $region15: #{tpu_custom_call.1} parent=1 // pred_check_branch
      %36 = sbr.rel (0) target = $region17
    $region16: #{tpu_custom_call.1} parent=1 // pred_region
      %37 = dma.done [#allocation6], 16384
    $region17: #{tpu_custom_call.1} parent=1 // pred_fallthru
      _
    %v38 = vld [vmem:[#allocation2] sm:$0xff]
    %v39 = vld [vmem:[#allocation2 + $0x8] sm:$0xff]
    %v40 = vld [vmem:[#allocation5] sm:$0xff]
    %v41 = vld [vmem:[#allocation5 + $0x8] sm:$0xff]
    %v42 = vld [vmem:[#allocation5 + $0x10] sm:$0xff]
    %v43 = vld [vmem:[#allocation5 + $0x18] sm:$0xff]
    %v44 = vld [vmem:[#allocation5 + $0x20] sm:$0xff]
    %v45 = vld [vmem:[#allocation5 + $0x28] sm:$0xff]
    %v46 = vld [vmem:[#allocation5 + $0x30] sm:$0xff]
    %v47 = vld [vmem:[#allocation5 + $0x38] sm:$0xff]
    %v48 = vld [vmem:[#allocation5 + $0x40] sm:$0xff]
    %v49 = vld [vmem:[#allocation5 + $0x48] sm:$0xff]
    %v50 = vld [vmem:[#allocation5 + $0x50] sm:$0xff]
    %v51 = vld [vmem:[#allocation5 + $0x58] sm:$0xff]
    %v52 = vld [vmem:[#allocation5 + $0x60] sm:$0xff]
    %v53 = vld [vmem:[#allocation5 + $0x68] sm:$0xff]
    %v54 = vld [vmem:[#allocation5 + $0x70] sm:$0xff]
    %v55 = vld [vmem:[#allocation5 + $0x78] sm:$0xff]
    %v56 = vld [vmem:[#allocation5 + $0x80] sm:$0xff]
    %v57 = vld [vmem:[#allocation5 + $0x88] sm:$0xff]
    %v58 = vld [vmem:[#allocation5 + $0x90] sm:$0xff]
    %v59 = vld [vmem:[#allocation5 + $0x98] sm:$0xff]
    %v60 = vld [vmem:[#allocation5 + $0xa0] sm:$0xff]
    %v61 = vld [vmem:[#allocation5 + $0xa8] sm:$0xff]
    %v62 = vld [vmem:[#allocation5 + $0xb0] sm:$0xff]
    %v63 = vld [vmem:[#allocation5 + $0xb8] sm:$0xff]
    %v64 = vld [vmem:[#allocation5 + $0xc0] sm:$0xff]
    %v65 = vld [vmem:[#allocation5 + $0xc8] sm:$0xff]
    %v66 = vld [vmem:[#allocation5 + $0xd0] sm:$0xff]
    %v67 = vld [vmem:[#allocation5 + $0xd8] sm:$0xff]
    %v68 = vld [vmem:[#allocation5 + $0xe0] sm:$0xff]
    %v69 = vld [vmem:[#allocation5 + $0xe8] sm:$0xff]
    %v70 = vld [vmem:[#allocation5 + $0xf0] sm:$0xff]
    %v71 = vld [vmem:[#allocation5 + $0xf8] sm:$0xff]
    %v72 = vld [vmem:[#allocation5 + $0x100] sm:$0xff]
    %v73 = vld [vmem:[#allocation5 + $0x108] sm:$0xff]
    %v74 = vld [vmem:[#allocation5 + $0x110] sm:$0xff]
    %v75 = vld [vmem:[#allocation5 + $0x118] sm:$0xff]
    %v76 = vld [vmem:[#allocation5 + $0x120] sm:$0xff]
    %v77 = vld [vmem:[#allocation5 + $0x128] sm:$0xff]
    %v78 = vld [vmem:[#allocation5 + $0x130] sm:$0xff]
    %v79 = vld [vmem:[#allocation5 + $0x138] sm:$0xff]
    %v80 = vld [vmem:[#allocation5 + $0x140] sm:$0xff]
    %v81 = vld [vmem:[#allocation5 + $0x148] sm:$0xff]
    %v82 = vld [vmem:[#allocation5 + $0x150] sm:$0xff]
    %v83 = vld [vmem:[#allocation5 + $0x158] sm:$0xff]
    %v84 = vld [vmem:[#allocation5 + $0x160] sm:$0xff]
    %v85 = vld [vmem:[#allocation5 + $0x168] sm:$0xff]
    %v86 = vld [vmem:[#allocation5 + $0x170] sm:$0xff]
    %v87 = vld [vmem:[#allocation5 + $0x178] sm:$0xff]
    %v88 = vld [vmem:[#allocation5 + $0x180] sm:$0xff]
    %v89 = vld [vmem:[#allocation5 + $0x188] sm:$0xff]
    %v90 = vld [vmem:[#allocation5 + $0x190] sm:$0xff]
    %v91 = vld [vmem:[#allocation5 + $0x198] sm:$0xff]
    %v92 = vld [vmem:[#allocation5 + $0x1a0] sm:$0xff]
    %v93 = vld [vmem:[#allocation5 + $0x1a8] sm:$0xff]
    %v94 = vld [vmem:[#allocation5 + $0x1b0] sm:$0xff]
    %v95 = vld [vmem:[#allocation5 + $0x1b8] sm:$0xff]
    %v96 = vld [vmem:[#allocation5 + $0x1c0] sm:$0xff]
    %v97 = vld [vmem:[#allocation5 + $0x1c8] sm:$0xff]
    %v98 = vld [vmem:[#allocation5 + $0x1d0] sm:$0xff]
    %v99 = vld [vmem:[#allocation5 + $0x1d8] sm:$0xff]
    %v100 = vld [vmem:[#allocation5 + $0x1e0] sm:$0xff]
    %v101 = vld [vmem:[#allocation5 + $0x1e8] sm:$0xff]
    %v102 = vld [vmem:[#allocation5 + $0x1f0] sm:$0xff]
    %v103 = vld [vmem:[#allocation5 + $0x1f8] sm:$0xff]
    %v104 = vld [vmem:[#allocation5 + $0x200] sm:$0xff]
    %v105 = vld [vmem:[#allocation5 + $0x208] sm:$0xff]
    %v106 = vld [vmem:[#allocation5 + $0x210] sm:$0xff]
    %v107 = vld [vmem:[#allocation5 + $0x218] sm:$0xff]
    %v108 = vld [vmem:[#allocation5 + $0x220] sm:$0xff]
    %v109 = vld [vmem:[#allocation5 + $0x228] sm:$0xff]
    %v110 = vld [vmem:[#allocation5 + $0x230] sm:$0xff]
    %v111 = vld [vmem:[#allocation5 + $0x238] sm:$0xff]
    %v112 = vld [vmem:[#allocation5 + $0x240] sm:$0xff]
    %v113 = vld [vmem:[#allocation5 + $0x248] sm:$0xff]
    %v114 = vld [vmem:[#allocation5 + $0x250] sm:$0xff]
    %v115 = vld [vmem:[#allocation5 + $0x258] sm:$0xff]
    %v116 = vld [vmem:[#allocation5 + $0x260] sm:$0xff]
    %v117 = vld [vmem:[#allocation5 + $0x268] sm:$0xff]
    %v118 = vld [vmem:[#allocation5 + $0x270] sm:$0xff]
    %v119 = vld [vmem:[#allocation5 + $0x278] sm:$0xff]
    %v120 = vld [vmem:[#allocation5 + $0x280] sm:$0xff]
    %v121 = vld [vmem:[#allocation5 + $0x288] sm:$0xff]
    %v122 = vld [vmem:[#allocation5 + $0x290] sm:$0xff]
    %v123 = vld [vmem:[#allocation5 + $0x298] sm:$0xff]
    %v124 = vld [vmem:[#allocation5 + $0x2a0] sm:$0xff]
    %v125 = vld [vmem:[#allocation5 + $0x2a8] sm:$0xff]
    %v126 = vld [vmem:[#allocation5 + $0x2b0] sm:$0xff]
    %v127 = vld [vmem:[#allocation5 + $0x2b8] sm:$0xff]
    %v128 = vld [vmem:[#allocation5 + $0x2c0] sm:$0xff]
    %v129 = vld [vmem:[#allocation5 + $0x2c8] sm:$0xff]
    %v130 = vld [vmem:[#allocation5 + $0x2d0] sm:$0xff]
    %v131 = vld [vmem:[#allocation5 + $0x2d8] sm:$0xff]
    %v132 = vld [vmem:[#allocation5 + $0x2e0] sm:$0xff]
    %v133 = vld [vmem:[#allocation5 + $0x2e8] sm:$0xff]
    %v134 = vld [vmem:[#allocation5 + $0x2f0] sm:$0xff]
    %v135 = vld [vmem:[#allocation5 + $0x2f8] sm:$0xff]
    %v136 = vld [vmem:[#allocation5 + $0x300] sm:$0xff]
    %v137 = vld [vmem:[#allocation5 + $0x308] sm:$0xff]
    %v138 = vld [vmem:[#allocation5 + $0x310] sm:$0xff]
    %v139 = vld [vmem:[#allocation5 + $0x318] sm:$0xff]
    %v140 = vld [vmem:[#allocation5 + $0x320] sm:$0xff]
    %v141 = vld [vmem:[#allocation5 + $0x328] sm:$0xff]
    %v142 = vld [vmem:[#allocation5 + $0x330] sm:$0xff]
    %v143 = vld [vmem:[#allocation5 + $0x338] sm:$0xff]
    %v144 = vld [vmem:[#allocation5 + $0x340] sm:$0xff]
    %v145 = vld [vmem:[#allocation5 + $0x348] sm:$0xff]
    %v146 = vld [vmem:[#allocation5 + $0x350] sm:$0xff]
    %v147 = vld [vmem:[#allocation5 + $0x358] sm:$0xff]
    %v148 = vld [vmem:[#allocation5 + $0x360] sm:$0xff]
    %v149 = vld [vmem:[#allocation5 + $0x368] sm:$0xff]
    %v150 = vld [vmem:[#allocation5 + $0x370] sm:$0xff]
    %v151 = vld [vmem:[#allocation5 + $0x378] sm:$0xff]
    %v152 = vld [vmem:[#allocation5 + $0x380] sm:$0xff]
    %v153 = vld [vmem:[#allocation5 + $0x388] sm:$0xff]
    %v154 = vld [vmem:[#allocation5 + $0x390] sm:$0xff]
    %v155 = vld [vmem:[#allocation5 + $0x398] sm:$0xff]
    %v156 = vld [vmem:[#allocation5 + $0x3a0] sm:$0xff]
    %v157 = vld [vmem:[#allocation5 + $0x3a8] sm:$0xff]
    %v158 = vld [vmem:[#allocation5 + $0x3b0] sm:$0xff]
    %v159 = vld [vmem:[#allocation5 + $0x3b8] sm:$0xff]
    %v160 = vld [vmem:[#allocation5 + $0x3c0] sm:$0xff]
    %v161 = vld [vmem:[#allocation5 + $0x3c8] sm:$0xff]
    %v162 = vld [vmem:[#allocation5 + $0x3d0] sm:$0xff]
    %v163 = vld [vmem:[#allocation5 + $0x3d8] sm:$0xff]
    %v164 = vld [vmem:[#allocation5 + $0x3e0] sm:$0xff]
    %v165 = vld [vmem:[#allocation5 + $0x3e8] sm:$0xff]
    %v166 = vld [vmem:[#allocation5 + $0x3f0] sm:$0xff]
    %v167 = vld [vmem:[#allocation5 + $0x3f8] sm:$0xff]
    %168 = vmatprep.subr.mxu0 %v101
    %169 = vmatpush1.msra.mxu0 %v100
    %170 = vmatprep.subr.mxu0 %v97
    %171 = vmatpush1.msra.mxu0 %v96
    %172 = vmatprep.subr.mxu0 %v93
    %173 = vmatpush1.msra.mxu0 %v92
    %174 = vmatprep.subr.mxu0 %v89
    %175 = vmatpush1.msra.mxu0 %v88
    %176 = vmatprep.subr.mxu0 %v85
    %177 = vmatpush1.msra.mxu0 %v84
    %178 = vmatprep.subr.mxu0 %v81
    %179 = vmatpush1.msra.mxu0 %v80
    %180 = vmatprep.subr.mxu0 %v77
    %181 = vmatpush1.msra.mxu0 %v76
    %182 = vmatprep.subr.mxu0 %v73
    %183 = vmatpush1.msra.mxu0 %v72
    %184 = vmatprep.subr.mxu0 %v69
    %185 = vmatpush1.msra.mxu0 %v68
    %186 = vmatprep.subr.mxu0 %v65
    %187 = vmatpush1.msra.mxu0 %v64
    %188 = vmatprep.subr.mxu0 %v61
    %189 = vmatpush1.msra.mxu0 %v60
    %190 = vmatprep.subr.mxu0 %v57
    %191 = vmatpush1.msra.mxu0 %v56
    %192 = vmatprep.subr.mxu0 %v53
    %193 = vmatpush1.msra.mxu0 %v52
    %194 = vmatprep.subr.mxu0 %v49
    %195 = vmatpush1.msra.mxu0 %v48
    %196 = vmatprep.subr.mxu0 %v45
    %197 = vmatpush1.msra.mxu0 %v44
    %198 = vmatprep.subr.mxu0 %v41
    %199 = vmatpush1.msra.mxu0 %v40
    %200 = vmatprep.subr.mxu0 %v165
    %201 = vmatpush2.msra.mxu0 %v164
    %202 = vmatprep.subr.mxu0 %v161
    %203 = vmatpush2.msra.mxu0 %v160
    %204 = vmatprep.subr.mxu0 %v157
    %205 = vmatpush2.msra.mxu0 %v156
    %206 = vmatprep.subr.mxu0 %v153
    %207 = vmatpush2.msra.mxu0 %v152
    %208 = vmatprep.subr.mxu0 %v149
    %209 = vmatpush2.msra.mxu0 %v148
    %210 = vmatprep.subr.mxu0 %v145
    %211 = vmatpush2.msra.mxu0 %v144
    %212 = vmatprep.subr.mxu0 %v141
    %213 = vmatpush2.msra.mxu0 %v140
    %214 = vmatprep.subr.mxu0 %v137
    %215 = vmatpush2.msra.mxu0 %v136
    %216 = vmatprep.subr.mxu0 %v133
    %217 = vmatpush2.msra.mxu0 %v132
    %218 = vmatprep.subr.mxu0 %v129
    %219 = vmatpush2.msra.mxu0 %v128
    %220 = vmatprep.subr.mxu0 %v125
    %221 = vmatpush2.msra.mxu0 %v124
    %222 = vmatprep.subr.mxu0 %v121
    %223 = vmatpush2.msra.mxu0 %v120
    %224 = vmatprep.subr.mxu0 %v117
    %225 = vmatpush2.msra.mxu0 %v116
    %226 = vmatprep.subr.mxu0 %v113
    %227 = vmatpush2.msra.mxu0 %v112
    %228 = vmatprep.subr.mxu0 %v109
    %229 = vmatpush2.msra.mxu0 %v108
    %230 = vmatprep.subr.mxu0 %v105
    %231 = vmatpush2.msra.mxu0 %v104
    %232 = vmatprep.mubr.f32.mxu0 %v39
    %233 = vmatmul.mubr.f32.gmra.mxu0 %v38
    %v234 = vpop.f32.mrf.mxu0
    %v235 = vadd.f32 0.0, %v234
    %v236 = vpop.f32.mrf.mxu0
    %v237 = vadd.f32 0.0, %v236
    %238 = vdwg.mxu0
    %239 = vmatprep.subr.mxu0 %v103
    %240 = vmatpush1.msra.mxu0 %v102
    %241 = vmatprep.subr.mxu0 %v99
    %242 = vmatpush1.msra.mxu0 %v98
    %243 = vmatprep.subr.mxu0 %v95
    %244 = vmatpush1.msra.mxu0 %v94
    %245 = vmatprep.subr.mxu0 %v91
    %246 = vmatpush1.msra.mxu0 %v90
    %247 = vmatprep.subr.mxu0 %v87
    %248 = vmatpush1.msra.mxu0 %v86
    %249 = vmatprep.subr.mxu0 %v83
    %250 = vmatpush1.msra.mxu0 %v82
    %251 = vmatprep.subr.mxu0 %v79
    %252 = vmatpush1.msra.mxu0 %v78
    %253 = vmatprep.subr.mxu0 %v75
    %254 = vmatpush1.msra.mxu0 %v74
    %255 = vmatprep.subr.mxu0 %v71
    %256 = vmatpush1.msra.mxu0 %v70
    %257 = vmatprep.subr.mxu0 %v67
    %258 = vmatpush1.msra.mxu0 %v66
    %259 = vmatprep.subr.mxu0 %v63
    %260 = vmatpush1.msra.mxu0 %v62
    %261 = vmatprep.subr.mxu0 %v59
    %262 = vmatpush1.msra.mxu0 %v58
    %263 = vmatprep.subr.mxu0 %v55
    %264 = vmatpush1.msra.mxu0 %v54
    %265 = vmatprep.subr.mxu0 %v51
    %266 = vmatpush1.msra.mxu0 %v50
    %267 = vmatprep.subr.mxu0 %v47
    %268 = vmatpush1.msra.mxu0 %v46
    %269 = vmatprep.subr.mxu0 %v43
    %270 = vmatpush1.msra.mxu0 %v42
    %271 = vmatprep.subr.mxu0 %v167
    %272 = vmatpush2.msra.mxu0 %v166
    %273 = vmatprep.subr.mxu0 %v163
    %274 = vmatpush2.msra.mxu0 %v162
    %275 = vmatprep.subr.mxu0 %v159
    %276 = vmatpush2.msra.mxu0 %v158
    %277 = vmatprep.subr.mxu0 %v155
    %278 = vmatpush2.msra.mxu0 %v154
    %279 = vmatprep.subr.mxu0 %v151
    %280 = vmatpush2.msra.mxu0 %v150
    %281 = vmatprep.subr.mxu0 %v147
    %282 = vmatpush2.msra.mxu0 %v146
    %283 = vmatprep.subr.mxu0 %v143
    %284 = vmatpush2.msra.mxu0 %v142
    %285 = vmatprep.subr.mxu0 %v139
    %286 = vmatpush2.msra.mxu0 %v138
    %287 = vmatprep.subr.mxu0 %v135
    %288 = vmatpush2.msra.mxu0 %v134
    %289 = vmatprep.subr.mxu0 %v131
    %290 = vmatpush2.msra.mxu0 %v130
    %291 = vmatprep.subr.mxu0 %v127
    %292 = vmatpush2.msra.mxu0 %v126
    %293 = vmatprep.subr.mxu0 %v123
    %294 = vmatpush2.msra.mxu0 %v122
    %295 = vmatprep.subr.mxu0 %v119
    %296 = vmatpush2.msra.mxu0 %v118
    %297 = vmatprep.subr.mxu0 %v115
    %298 = vmatpush2.msra.mxu0 %v114
    %299 = vmatprep.subr.mxu0 %v111
    %300 = vmatpush2.msra.mxu0 %v110
    %301 = vmatprep.subr.mxu0 %v107
    %302 = vmatpush2.msra.mxu0 %v106
    %303 = vmatprep.mubr.f32.mxu0 %v39
    %304 = vmatmul.mubr.f32.gmra.mxu0 %v38
    %v305 = vpop.f32.mrf.mxu0
    %v306 = vadd.f32 0.0, %v305
    %v307 = vpop.f32.mrf.mxu0
    %v308 = vadd.f32 0.0, %v307
    %309 = vdwg.mxu0
    %310 = vst [vmem:[#allocation7] sm:$0xff] %v235
    %311 = vst [vmem:[#allocation7 + $0x8] sm:$0xff] %v237
    %312 = vst [vmem:[#allocation7 + $0x10] sm:$0xff] %v306
    %313 = vst [vmem:[#allocation7 + $0x18] sm:$0xff] %v308
    // Predicated region
    $region18: #{tpu_custom_call.1} parent=1 // pred_check
      _
    $region19: #{tpu_custom_call.1} parent=1 // pred_check_branch
      %315 = sbr.rel (0) target = $region21
    $region20: #{tpu_custom_call.1} parent=1 // pred_region
      %s317 = ssub.s32 512, 512
      %318 = vsyncadd [#allocation4], %s317
      %s320 = sshll.u32 [#allocation7], 4
      %s321 = int_to_ptr.vmem [resolvable:$true] %s320
      %323 = dma.vmem_to_hbm [thread:$0]  %s321, 512, %s2, [#allocation4]
    $region21: #{tpu_custom_call.1} parent=1 // pred_fallthru
      _
    // Predicated region
    $region22: #{tpu_custom_call.1} parent=1 // pred_check
      _
    $region23: #{tpu_custom_call.1} parent=1 // pred_check_branch
      %325 = sbr.rel (0) target = $region25
    $region24: #{tpu_custom_call.1} parent=1 // pred_region
      %326 = dma.done [#allocation4], 512
    $region25: #{tpu_custom_call.1} parent=1 // pred_fallthru
      _
    %327 = vsyncpa [#allocation3], 1
    %328 = vsyncpa [#allocation6], 1
    %329 = vsyncpa [#allocation4], 1

</llo_original>
